<compile_context>
chip_gen: v7x
topology: tpu7x:2x2x1
jax: 0.10.0
libtpu: 0.0.40
codegen_flags: <defaults>
</compile_context>

<pallas_src>
import functools

import jax
import jax.numpy as jnp
from jax.experimental import pallas as pl
from jax.experimental.pallas import tpu as pltpu

LEAKY_SLOPE = 0.01  # nn.LeakyReLU() default negative_slope


def _leaky_relu(h):
    # f32 VPU select (v5e-safe: no bf16 elementwise there).
    return jnp.where(h > 0, h, LEAKY_SLOPE * h)


def smlp_kernel(x_ref, w1_ref, b1_ref, w2_ref, b2_ref, w3_ref, b3_ref,
                w4_ref, b4_ref, o_ref, *, dot_dtype):
    # Lane-dense transposed layout: features on sublanes, batch on lanes.
    #   g_l : (H_l, bm),  W_l^T : (H_{l+1}, H_l),  b_l : (H_{l+1}, 1).
    # The encode affine is already folded into (w1, b1), so x feeds the first
    # dot directly.
    g = x_ref[...]

    def layer(g, w_ref, b_ref):
        # MXU matmul (bf16 or f32 operands) with f32 accumulation; bias in f32.
        return jnp.dot(w_ref[...], g.astype(dot_dtype),
                       preferred_element_type=jnp.float32) + b_ref[...]

    g = _leaky_relu(layer(g, w1_ref, b1_ref))
    g = _leaky_relu(layer(g, w2_ref, b2_ref))
    g = _leaky_relu(layer(g, w3_ref, b3_ref))
    g = layer(g, w4_ref, b4_ref)

    o_ref[...] = g.astype(o_ref.dtype)   # (D_out, bm): lane-dense store


def _vmem_budget_bytes():
    """Returns (scoped-VMEM limit to request, bytes the bm heuristic may fill)."""
    cap = None
    try:
        cap = int(getattr(pltpu.get_tpu_info(), "vmem_capacity_bytes", 0)) or None
    except Exception:
        cap = None
    if cap is None:
        cap = 64 << 20                       # conservative: v7x per-TC physical VMEM
    limit = min((cap * 3) // 4, 96 << 20)    # ~96 MiB on v5e/v6e, ~48 MiB on v7x
    return limit, (limit * 3) // 4


def _pick_bm(B, per_col_bytes, static_bytes, budget_bytes):
    """Largest lane-aligned batch tile that fits VMEM and keeps >= 2 grid steps."""
    if B <= 128:
        return B                              # single full-extent block
    for cand in (2048, 1024, 512, 256, 128):  # largest-first; >=2 steps for v7x TCs
        if pl.cdiv(B, cand) >= 2 and cand * per_col_bytes + static_bytes <= budget_bytes:
            return cand
    return 128


def smlp_forward(x, params, xmin, xmax, *, bm=None, use_bf16=True,
                 x_is_transposed=False, return_transposed=False):
    """SMLP forward.

    x: (B, D_in) f32, or (D_in, B) if x_is_transposed.
    params: dict with w1..w4 of shape (in, out) and b1..b4 of shape (1, out).
    """
    if float(xmax) == float(xmin):
        raise ValueError("xmax must differ from xmin")

    if x_is_transposed:
        D_in, B = x.shape
        x_t = x
    else:
        B, D_in = x.shape
        # TODO(synk): this transpose is an extra XLA-side HBM pass over x; callers
        # that can produce x in (D_in, B) layout should pass x_is_transposed=True.
        x_t = x.T

    H1 = params["w1"].shape[1]
    H2 = params["w2"].shape[1]
    H3 = params["w3"].shape[1]
    D_out = params["w4"].shape[1]

    # On v5e (no bf16 VPU, kernel nowhere near MXU-bound) benchmark use_bf16=False.
    dot_dtype = jnp.bfloat16 if use_bf16 else jnp.float32

    # Fold encode ((x - xmin)/(xmax - xmin) - 0.5 == x*scale + offset) into layer 1
    # at trace time (exact algebra on tiny weights, done once).
    scale = 1.0 / (float(xmax) - float(xmin))
    offset = -float(xmin) * scale - 0.5
    w1_eff = params["w1"] * scale
    b1_eff = params["b1"] + offset * jnp.sum(params["w1"], axis=0, keepdims=True)

    # Transposed (out, in) weights / (out, 1) biases for the lane-dense pipeline.
    wts = [w1_eff.T.astype(dot_dtype)] + \
          [params[f"w{i}"].T.astype(dot_dtype) for i in (2, 3, 4)]
    bts = [b1_eff.T.astype(jnp.float32)] + \
          [params[f"b{i}"].T.astype(jnp.float32) for i in (2, 3, 4)]

    vmem_limit, vmem_budget = _vmem_budget_bytes()

    if bm is None:
        rnd8 = lambda n: -(-n // 8) * 8
        rnd128 = lambda n: -(-n // 128) * 128
        w_item = jnp.dtype(dot_dtype).itemsize
        # Per batch-column bytes: double-buffered f32 x/out tiles + f32 hidden
        # activations + their dot-operand casts (all lane-dense in this layout).
        per_col = 4 * (2 * rnd8(D_in) + 2 * rnd8(D_out)
                       + rnd8(H1) + rnd8(H2) + rnd8(H3)) \
                  + w_item * (rnd8(D_in) + rnd8(H1) + rnd8(H2) + rnd8(H3))
        # Constant-index weight/bias blocks (counted double-buffered to be safe;
        # pl.Buffered(1) would halve this — negligible at these sizes).
        static = 2 * w_item * (rnd8(H1) * rnd128(D_in) + rnd8(H2) * rnd128(H1)
                               + rnd8(H3) * rnd128(H2) + rnd8(D_out) * rnd128(H3)) \
                 + 2 * 4 * 128 * (rnd8(H1) + rnd8(H2) + rnd8(H3) + rnd8(D_out))
        bm = _pick_bm(B, per_col, static, vmem_budget)
    if bm != B and bm % 128 != 0:
        raise ValueError("bm must equal the batch size or be a multiple of 128")

    # Weight/bias blocks: constant block index across the grid -> fetched once.
    def full(shape):
        return pl.BlockSpec(shape, lambda i: tuple(0 for _ in shape))

    kernel = functools.partial(smlp_kernel, dot_dtype=dot_dtype)

    out_t = pl.pallas_call(
        kernel,
        out_shape=jax.ShapeDtypeStruct((D_out, B), jnp.float32),
        grid_spec=pltpu.PrefetchScalarGridSpec(
            num_scalar_prefetch=0,
            grid=(pl.cdiv(B, bm),),            # ragged final block handled by Pallas
            in_specs=[
                pl.BlockSpec((D_in, bm), lambda i: (0, i)),   # x^T tile over batch
                full((H1, D_in)),  full((H1, 1)),
                full((H2, H1)),    full((H2, 1)),
                full((H3, H2)),    full((H3, 1)),
                full((D_out, H3)), full((D_out, 1)),
            ],
            out_specs=pl.BlockSpec((D_out, bm), lambda i: (0, i)),
        ),
        compiler_params=pltpu.CompilerParams(
            dimension_semantics=("parallel",),
            vmem_limit_bytes=int(vmem_limit)),
    )(x_t, wts[0], bts[0], wts[1], bts[1], wts[2], bts[2], wts[3], bts[3])

    return out_t if return_transposed else out_t.T


def init_params(key, D_in, H1, H2, H3, D_out):
    """Deterministic synthetic init (PyTorch-Linear-like uniform fan-in bounds)."""
    dims = [(D_in, H1), (H1, H2), (H2, H3), (H3, D_out)]
    params = {}
    for idx, (fan_in, fan_out) in enumerate(dims, start=1):
        key, kw, kb = jax.random.split(key, 3)
        bound = 1.0 / jnp.sqrt(fan_in)
        params[f"w{idx}"] = jax.random.uniform(
            kw, (fan_in, fan_out), jnp.float32, -bound, bound)
        params[f"b{idx}"] = jax.random.uniform(
            kb, (1, fan_out), jnp.float32, -bound, bound)
    return params


def smlp_reference(x, params, xmin, xmax):
    """Pure-JAX reference for correctness check."""
    h = (x - xmin) / (xmax - xmin) - 0.5
    h = jax.nn.leaky_relu(h @ params["w1"] + params["b1"], LEAKY_SLOPE)
    h = jax.nn.leaky_relu(h @ params["w2"] + params["b2"], LEAKY_SLOPE)
    h = jax.nn.leaky_relu(h @ params["w3"] + params["b3"], LEAKY_SLOPE)
    return h @ params["w4"] + params["b4"]


if __name__ == "__main__":
    B, D_in, H1, H2, H3, D_out = 8, 16, 32, 32, 32, 8
    xmin, xmax = -2.0, 3.0

    key = jax.random.PRNGKey(0)
    key, kx = jax.random.split(key)
    x = jax.random.uniform(kx, (B, D_in), jnp.float32, xmin, xmax)
    params = init_params(key, D_in, H1, H2, H3, D_out)

    ref = smlp_reference(x, params, xmin, xmax)

    # f32-MXU path (encode folded into layer 1, so last-ulp differences expected).
    out_f32 = jax.block_until_ready(
        smlp_forward(x, params, xmin, xmax, use_bf16=False))
    assert out_f32.shape == (B, D_out)
    assert jnp.allclose(out_f32, ref, atol=1e-4, rtol=1e-4), "f32 mismatch vs reference"

    # Default bf16-MXU path (fast path on v6e/v7x): looser tolerance.
    out = jax.block_until_ready(smlp_forward(x, params, xmin, xmax))
    assert out.shape == (B, D_out)
    assert jnp.allclose(out, ref, atol=5e-2, rtol=5e-2), "bf16 mismatch vs reference"

    # Larger non-divisible batch: exercises bm=256 tiles, 2 grid steps (v7x both
    # TCs) and the ragged final block (no jnp.pad round-trip).
    B2 = 300
    key, kx2 = jax.random.split(key)
    x2 = jax.random.uniform(kx2, (B2, D_in), jnp.float32, xmin, xmax)
    ref2 = smlp_reference(x2, params, xmin, xmax)
    out2 = jax.block_until_ready(smlp_forward(x2, params, xmin, xmax))
    assert out2.shape == (B2, D_out)
    assert jnp.allclose(out2, ref2, atol=5e-2, rtol=5e-2), "bf16 mismatch (ragged batch)"

    print("KERNEL_OK")
</pallas_src>

<mosaic_0001>
module attributes {stable_mosaic.version = 11 : i64} {
  func.func @smlp_kernel(%arg0: i32, %arg1: memref<16x8xf32, #tpu.memory_space<vmem>>, %arg2: memref<32x16xf32, #tpu.memory_space<vmem>>, %arg3: memref<32x1xf32, #tpu.memory_space<vmem>>, %arg4: memref<32x32xf32, #tpu.memory_space<vmem>>, %arg5: memref<32x1xf32, #tpu.memory_space<vmem>>, %arg6: memref<32x32xf32, #tpu.memory_space<vmem>>, %arg7: memref<32x1xf32, #tpu.memory_space<vmem>>, %arg8: memref<8x32xf32, #tpu.memory_space<vmem>>, %arg9: memref<8x1xf32, #tpu.memory_space<vmem>>, %arg10: memref<8x8xf32, #tpu.memory_space<vmem>>) attributes {dimension_semantics = [#tpu.dimension_semantics<parallel>], iteration_bounds = array<i64: 1>, scalar_prefetch = 0 : i64, scratch_operands = 0 : i64, tpu.core_type = #tpu.core_type<tc>, window_params = [{transform_indices = @transform_0, window_bounds = array<i64: 16, 8>}, {pipeline_mode = #tpu.pipeline_mode<synchronous>, transform_indices = @transform_1, window_bounds = array<i64: 32, 16>}, {pipeline_mode = #tpu.pipeline_mode<synchronous>, transform_indices = @transform_2, window_bounds = array<i64: 32, 1>}, {pipeline_mode = #tpu.pipeline_mode<synchronous>, transform_indices = @transform_3, window_bounds = array<i64: 32, 32>}, {pipeline_mode = #tpu.pipeline_mode<synchronous>, transform_indices = @transform_4, window_bounds = array<i64: 32, 1>}, {pipeline_mode = #tpu.pipeline_mode<synchronous>, transform_indices = @transform_5, window_bounds = array<i64: 32, 32>}, {pipeline_mode = #tpu.pipeline_mode<synchronous>, transform_indices = @transform_6, window_bounds = array<i64: 32, 1>}, {pipeline_mode = #tpu.pipeline_mode<synchronous>, transform_indices = @transform_7, window_bounds = array<i64: 8, 32>}, {pipeline_mode = #tpu.pipeline_mode<synchronous>, transform_indices = @transform_8, window_bounds = array<i64: 8, 1>}, {transform_indices = @transform_9, window_bounds = array<i64: 8, 8>}]} {
    %c0 = arith.constant 0 : index
    %c0_0 = arith.constant 0 : index
    %0 = vector.load %arg1[%c0, %c0_0] : memref<16x8xf32, #tpu.memory_space<vmem>>, vector<16x8xf32>
    %c0_1 = arith.constant 0 : index
    %c0_2 = arith.constant 0 : index
    %1 = vector.load %arg2[%c0_1, %c0_2] : memref<32x16xf32, #tpu.memory_space<vmem>>, vector<32x16xf32>
    %cst = arith.constant dense<0.000000e+00> : vector<32x8xf32>
    %2 = tpu.matmul %1, %0, %cst {dimension_numbers = #tpu.dot_dimension_numbers<[1], [0], [0], [1], [0, 0, 1, 1], [], []>} : vector<32x16xf32>, vector<16x8xf32>, vector<32x8xf32> -> vector<32x8xf32>
    %c0_3 = arith.constant 0 : index
    %c0_4 = arith.constant 0 : index
    %3 = vector.load %arg3[%c0_3, %c0_4] : memref<32x1xf32, #tpu.memory_space<vmem>>, vector<32x1xf32>
    %4 = vector.broadcast %3 : vector<32x1xf32> to vector<32x8xf32>
    %5 = arith.addf %2, %4 : vector<32x8xf32>
    %cst_5 = arith.constant 0.000000e+00 : f32
    %6 = vector.broadcast %cst_5 : f32 to vector<32x8xf32>
    %7 = arith.cmpf ogt, %5, %6 : vector<32x8xf32>
    %cst_6 = arith.constant 0.00999999977 : f32
    %8 = vector.broadcast %cst_6 : f32 to vector<32x8xf32>
    %9 = arith.mulf %8, %5 : vector<32x8xf32>
    %10 = arith.select %7, %5, %9 : vector<32x8xi1>, vector<32x8xf32>
    %c0_7 = arith.constant 0 : index
    %c0_8 = arith.constant 0 : index
    %11 = vector.load %arg4[%c0_7, %c0_8] : memref<32x32xf32, #tpu.memory_space<vmem>>, vector<32x32xf32>
    %cst_9 = arith.constant dense<0.000000e+00> : vector<32x8xf32>
    %12 = tpu.matmul %11, %10, %cst_9 {dimension_numbers = #tpu.dot_dimension_numbers<[1], [0], [0], [1], [0, 0, 1, 1], [], []>} : vector<32x32xf32>, vector<32x8xf32>, vector<32x8xf32> -> vector<32x8xf32>
    %c0_10 = arith.constant 0 : index
    %c0_11 = arith.constant 0 : index
    %13 = vector.load %arg5[%c0_10, %c0_11] : memref<32x1xf32, #tpu.memory_space<vmem>>, vector<32x1xf32>
    %14 = vector.broadcast %13 : vector<32x1xf32> to vector<32x8xf32>
    %15 = arith.addf %12, %14 : vector<32x8xf32>
    %cst_12 = arith.constant 0.000000e+00 : f32
    %16 = vector.broadcast %cst_12 : f32 to vector<32x8xf32>
    %17 = arith.cmpf ogt, %15, %16 : vector<32x8xf32>
    %cst_13 = arith.constant 0.00999999977 : f32
    %18 = vector.broadcast %cst_13 : f32 to vector<32x8xf32>
    %19 = arith.mulf %18, %15 : vector<32x8xf32>
    %20 = arith.select %17, %15, %19 : vector<32x8xi1>, vector<32x8xf32>
    %c0_14 = arith.constant 0 : index
    %c0_15 = arith.constant 0 : index
    %21 = vector.load %arg6[%c0_14, %c0_15] : memref<32x32xf32, #tpu.memory_space<vmem>>, vector<32x32xf32>
    %cst_16 = arith.constant dense<0.000000e+00> : vector<32x8xf32>
    %22 = tpu.matmul %21, %20, %cst_16 {dimension_numbers = #tpu.dot_dimension_numbers<[1], [0], [0], [1], [0, 0, 1, 1], [], []>} : vector<32x32xf32>, vector<32x8xf32>, vector<32x8xf32> -> vector<32x8xf32>
    %c0_17 = arith.constant 0 : index
    %c0_18 = arith.constant 0 : index
    %23 = vector.load %arg7[%c0_17, %c0_18] : memref<32x1xf32, #tpu.memory_space<vmem>>, vector<32x1xf32>
    %24 = vector.broadcast %23 : vector<32x1xf32> to vector<32x8xf32>
    %25 = arith.addf %22, %24 : vector<32x8xf32>
    %cst_19 = arith.constant 0.000000e+00 : f32
    %26 = vector.broadcast %cst_19 : f32 to vector<32x8xf32>
    %27 = arith.cmpf ogt, %25, %26 : vector<32x8xf32>
    %cst_20 = arith.constant 0.00999999977 : f32
    %28 = vector.broadcast %cst_20 : f32 to vector<32x8xf32>
    %29 = arith.mulf %28, %25 : vector<32x8xf32>
    %30 = arith.select %27, %25, %29 : vector<32x8xi1>, vector<32x8xf32>
    %c0_21 = arith.constant 0 : index
    %c0_22 = arith.constant 0 : index
    %31 = vector.load %arg8[%c0_21, %c0_22] : memref<8x32xf32, #tpu.memory_space<vmem>>, vector<8x32xf32>
    %cst_23 = arith.constant dense<0.000000e+00> : vector<8x8xf32>
    %32 = tpu.matmul %31, %30, %cst_23 {dimension_numbers = #tpu.dot_dimension_numbers<[1], [0], [0], [1], [0, 0, 1, 1], [], []>} : vector<8x32xf32>, vector<32x8xf32>, vector<8x8xf32> -> vector<8x8xf32>
    %c0_24 = arith.constant 0 : index
    %c0_25 = arith.constant 0 : index
    %33 = vector.load %arg9[%c0_24, %c0_25] : memref<8x1xf32, #tpu.memory_space<vmem>>, vector<8x1xf32>
    %34 = vector.broadcast %33 : vector<8x1xf32> to vector<8x8xf32>
    %35 = arith.addf %32, %34 : vector<8x8xf32>
    %c0_26 = arith.constant 0 : index
    %c0_27 = arith.constant 0 : index
    %36 = vector.load %arg10[%c0_26, %c0_27] : memref<8x8xf32, #tpu.memory_space<vmem>>, vector<8x8xf32>
    tpu.vector_store %arg10[%c0_26, %c0_27], %35 {strides = array<i32>} : memref<8x8xf32, #tpu.memory_space<vmem>>, vector<8x8xf32>,
    return
  }
  func.func @transform_0(%arg0: i32) -> (i32, i32) {
    %c0_i32 = arith.constant 0 : i32
    %c0_i32_0 = arith.constant 0 : i32
    return %c0_i32, %arg0 : i32, i32
  }
  func.func @transform_1(%arg0: i32) -> (i32, i32) {
    %c0_i32 = arith.constant 0 : i32
    %c0_i32_0 = arith.constant 0 : i32
    %c0_i32_1 = arith.constant 0 : i32
    return %c0_i32, %c0_i32_0 : i32, i32
  }
  func.func @transform_2(%arg0: i32) -> (i32, i32) {
    %c0_i32 = arith.constant 0 : i32
    %c0_i32_0 = arith.constant 0 : i32
    %c0_i32_1 = arith.constant 0 : i32
    return %c0_i32, %c0_i32_0 : i32, i32
  }
  func.func @transform_3(%arg0: i32) -> (i32, i32) {
    %c0_i32 = arith.constant 0 : i32
    %c0_i32_0 = arith.constant 0 : i32
    %c0_i32_1 = arith.constant 0 : i32
    return %c0_i32, %c0_i32_0 : i32, i32
  }
  func.func @transform_4(%arg0: i32) -> (i32, i32) {
    %c0_i32 = arith.constant 0 : i32
    %c0_i32_0 = arith.constant 0 : i32
    %c0_i32_1 = arith.constant 0 : i32
    return %c0_i32, %c0_i32_0 : i32, i32
  }
  func.func @transform_5(%arg0: i32) -> (i32, i32) {
    %c0_i32 = arith.constant 0 : i32
    %c0_i32_0 = arith.constant 0 : i32
    %c0_i32_1 = arith.constant 0 : i32
    return %c0_i32, %c0_i32_0 : i32, i32
  }
  func.func @transform_6(%arg0: i32) -> (i32, i32) {
    %c0_i32 = arith.constant 0 : i32
    %c0_i32_0 = arith.constant 0 : i32
    %c0_i32_1 = arith.constant 0 : i32
    return %c0_i32, %c0_i32_0 : i32, i32
  }
  func.func @transform_7(%arg0: i32) -> (i32, i32) {
    %c0_i32 = arith.constant 0 : i32
    %c0_i32_0 = arith.constant 0 : i32
    %c0_i32_1 = arith.constant 0 : i32
    return %c0_i32, %c0_i32_0 : i32, i32
  }
  func.func @transform_8(%arg0: i32) -> (i32, i32) {
    %c0_i32 = arith.constant 0 : i32
    %c0_i32_0 = arith.constant 0 : i32
    %c0_i32_1 = arith.constant 0 : i32
    return %c0_i32, %c0_i32_0 : i32, i32
  }
  func.func @transform_9(%arg0: i32) -> (i32, i32) {
    %c0_i32 = arith.constant 0 : i32
    %c0_i32_0 = arith.constant 0 : i32
    return %c0_i32, %arg0 : i32, i32
  }
}

</mosaic_0001>

<llo_original>
// kernel: tpu_custom_call.1
$region0: #{tpu_custom_call.1}
  #allocation0 [shape = 'u32[]', space=smem, size = 0x4, offset = 0x4, fixed_abs, tag = 'smem constant byte address 0x4 - core index']
  #allocation1 [shape = 'u32[144,128]{1,0:T(1,128)}', space=vmem, size = 0x12000, scoped, tag = 'internal scratch']
  %s0 = inlined_call_operand.vmem [shape: f32[16,8], index: 0, kind: input, shape index: {}]
  %s1 = inlined_call_operand.vmem [shape: f32[32,16], index: 1, kind: input, shape index: {}]
  %s2 = inlined_call_operand.vmem [shape: f32[32,1], index: 2, kind: input, shape index: {}]
  %s3 = inlined_call_operand.vmem [shape: f32[32,32], index: 3, kind: input, shape index: {}]
  %s4 = inlined_call_operand.vmem [shape: f32[32,1], index: 4, kind: input, shape index: {}]
  %s5 = inlined_call_operand.vmem [shape: f32[32,32], index: 5, kind: input, shape index: {}]
  %s6 = inlined_call_operand.vmem [shape: f32[32,1], index: 6, kind: input, shape index: {}]
  %s7 = inlined_call_operand.vmem [shape: f32[8,32], index: 7, kind: input, shape index: {}]
  %s8 = inlined_call_operand.vmem [shape: f32[8,1], index: 8, kind: input, shape index: {}]
  %s9 = inlined_call_operand.hbm [shape: f32[8,8], index: 9, kind: output, shape index: {}]
  %s10 = sld [smem:[#allocation0]]
  $region46: #{tpu_custom_call.1} parent=0
    _
  %s12 = ssub.s32 1, %s10
  %s13 = scalar_select 0, %s12, %s10
  $region1: #{tpu_custom_call.1} parent=0
    #allocation2 [shape = 'u8[4096]{0}', space=vmem, size = 0x1000, scoped, tag = 'output window, operand 0, single buffered']
    #allocation3 [shape = 's32[1]{0}', space=sflag, size = 0x4, scoped, tag = 'scoped memory for tpu_custom_call.1']
    %14 = vsyncpa [#allocation3], 0
    // Predicated region
    $region2: #{tpu_custom_call.1} parent=1 // pred_check
      _
    $region3: #{tpu_custom_call.1} parent=1 // pred_check_branch
      %16 = sbr.rel (0) target = $region5
    $region4: #{tpu_custom_call.1} parent=1 // pred_region
      _
    $region5: #{tpu_custom_call.1} parent=1 // pred_fallthru
      _
    // Predicated region
    $region6: #{tpu_custom_call.1} parent=1 // pred_check
      _
    $region7: #{tpu_custom_call.1} parent=1 // pred_check_branch
      %18 = sbr.rel (0) target = $region9
    $region8: #{tpu_custom_call.1} parent=1 // pred_region
      _
    $region9: #{tpu_custom_call.1} parent=1 // pred_fallthru
      _
    // Predicated region
    $region10: #{tpu_custom_call.1} parent=1 // pred_check
      _
    $region11: #{tpu_custom_call.1} parent=1 // pred_check_branch
      %20 = sbr.rel (0) target = $region13
    $region12: #{tpu_custom_call.1} parent=1 // pred_region
      _
    $region13: #{tpu_custom_call.1} parent=1 // pred_fallthru
      _
    // Predicated region
    $region14: #{tpu_custom_call.1} parent=1 // pred_check
      _
    $region15: #{tpu_custom_call.1} parent=1 // pred_check_branch
      %22 = sbr.rel (0) target = $region17
    $region16: #{tpu_custom_call.1} parent=1 // pred_region
      _
    $region17: #{tpu_custom_call.1} parent=1 // pred_fallthru
      _
    // Predicated region
    $region18: #{tpu_custom_call.1} parent=1 // pred_check
      _
    $region19: #{tpu_custom_call.1} parent=1 // pred_check_branch
      %24 = sbr.rel (0) target = $region21
    $region20: #{tpu_custom_call.1} parent=1 // pred_region
      _
    $region21: #{tpu_custom_call.1} parent=1 // pred_fallthru
      _
    // Predicated region
    $region22: #{tpu_custom_call.1} parent=1 // pred_check
      _
    $region23: #{tpu_custom_call.1} parent=1 // pred_check_branch
      %26 = sbr.rel (0) target = $region25
    $region24: #{tpu_custom_call.1} parent=1 // pred_region
      _
    $region25: #{tpu_custom_call.1} parent=1 // pred_fallthru
      _
    // Predicated region
    $region26: #{tpu_custom_call.1} parent=1 // pred_check
      _
    $region27: #{tpu_custom_call.1} parent=1 // pred_check_branch
      %28 = sbr.rel (0) target = $region29
    $region28: #{tpu_custom_call.1} parent=1 // pred_region
      _
    $region29: #{tpu_custom_call.1} parent=1 // pred_fallthru
      _
    // Predicated region
    $region30: #{tpu_custom_call.1} parent=1 // pred_check
      _
    $region31: #{tpu_custom_call.1} parent=1 // pred_check_branch
      %30 = sbr.rel (0) target = $region33
    $region32: #{tpu_custom_call.1} parent=1 // pred_region
      _
    $region33: #{tpu_custom_call.1} parent=1 // pred_fallthru
      _
    // Predicated region
    $region34: #{tpu_custom_call.1} parent=1 // pred_check
      _
    $region35: #{tpu_custom_call.1} parent=1 // pred_check_branch
      %32 = sbr.rel (0) target = $region37
    $region36: #{tpu_custom_call.1} parent=1 // pred_region
      _
    $region37: #{tpu_custom_call.1} parent=1 // pred_fallthru
      _
    %v33 = vld [vmem:[%s0] sm:$0xff]
    %v34 = vld [vmem:[%s0 + $0x8] sm:$0xff]
    %v35 = vld [vmem:[%s1] sm:$0xff]
    %v36 = vld [vmem:[%s1 + $0x8] sm:$0xff]
    %v37 = vld [vmem:[%s1 + $0x10] sm:$0xff]
    %v38 = vld [vmem:[%s1 + $0x18] sm:$0xff]
    %v39 = vld [vmem:[%s2] sm:$0xff]
    %v40 = vld [vmem:[%s2 + $0x8] sm:$0xff]
    %v41 = vld [vmem:[%s2 + $0x10] sm:$0xff]
    %v42 = vld [vmem:[%s2 + $0x18] sm:$0xff]
    %44 = vset.pattern.permute.xlu0 0
    %45 = vperm.xlu0 %44, %v39
    %v46 = vpop.permute.xlu0 %45
    %49 = vset.pattern.permute.xlu0 0
    %50 = vperm.xlu0 %49, %v40
    %v51 = vpop.permute.xlu0 %50
    %54 = vset.pattern.permute.xlu0 0
    %55 = vperm.xlu0 %54, %v41
    %v56 = vpop.permute.xlu0 %55
    %59 = vset.pattern.permute.xlu0 0
    %60 = vperm.xlu0 %59, %v42
    %v61 = vpop.permute.xlu0 %60
    %vm63 = vcmask 130048
    %v65 = vsel %vm63, %v35, 0
    %v68 = vsel %vm63, %v36, 0
    %v71 = vsel %vm63, %v37, 0
    %v74 = vsel %vm63, %v38, 0
    %76 = vmatprep.subr.mxu0 0.0
    %77 = vmatpush1.msra.mxu0 %v33
    %78 = vmatprep.subr.mxu0 0.0
    %79 = vmatpush1.msra.mxu0 %v34
    %80 = vmatprep.subr.mxu0 0.0
    %81 = vmatpush1.msra.mxu0 0.0
    %82 = vmatprep.subr.mxu0 0.0
    %83 = vmatpush1.msra.mxu0 0.0
    %84 = vmatprep.subr.mxu0 0.0
    %85 = vmatpush1.msra.mxu0 0.0
    %86 = vmatprep.subr.mxu0 0.0
    %87 = vmatpush1.msra.mxu0 0.0
    %88 = vmatprep.subr.mxu0 0.0
    %89 = vmatpush1.msra.mxu0 0.0
    %90 = vmatprep.subr.mxu0 0.0
    %91 = vmatpush1.msra.mxu0 0.0
    %92 = vmatprep.subr.mxu0 0.0
    %93 = vmatpush1.msra.mxu0 0.0
    %94 = vmatprep.subr.mxu0 0.0
    %95 = vmatpush1.msra.mxu0 0.0
    %96 = vmatprep.subr.mxu0 0.0
    %97 = vmatpush1.msra.mxu0 0.0
    %98 = vmatprep.subr.mxu0 0.0
    %99 = vmatpush1.msra.mxu0 0.0
    %100 = vmatprep.subr.mxu0 0.0
    %101 = vmatpush1.msra.mxu0 0.0
    %102 = vmatprep.subr.mxu0 0.0
    %103 = vmatpush1.msra.mxu0 0.0
    %104 = vmatprep.subr.mxu0 0.0
    %105 = vmatpush1.msra.mxu0 0.0
    %106 = vmatprep.subr.mxu0 0.0
    %107 = vmatpush1.msra.mxu0 0.0
    %108 = vmatprep.subr.mxu0 0.0
    %109 = vmatpush1.msra.mxu0 0.0
    %110 = vmatprep.subr.mxu0 0.0
    %111 = vmatpush1.msra.mxu0 0.0
    %112 = vmatprep.subr.mxu0 0.0
    %113 = vmatpush1.msra.mxu0 0.0
    %114 = vmatprep.subr.mxu0 0.0
    %115 = vmatpush1.msra.mxu0 0.0
    %116 = vmatprep.subr.mxu0 0.0
    %117 = vmatpush1.msra.mxu0 0.0
    %118 = vmatprep.subr.mxu0 0.0
    %119 = vmatpush1.msra.mxu0 0.0
    %120 = vmatprep.subr.mxu0 0.0
    %121 = vmatpush1.msra.mxu0 0.0
    %122 = vmatprep.subr.mxu0 0.0
    %123 = vmatpush1.msra.mxu0 0.0
    %124 = vmatprep.subr.mxu0 0.0
    %125 = vmatpush1.msra.mxu0 0.0
    %126 = vmatprep.subr.mxu0 0.0
    %127 = vmatpush1.msra.mxu0 0.0
    %128 = vmatprep.subr.mxu0 0.0
    %129 = vmatpush1.msra.mxu0 0.0
    %130 = vmatprep.subr.mxu0 0.0
    %131 = vmatpush1.msra.mxu0 0.0
    %132 = vmatprep.subr.mxu0 0.0
    %133 = vmatpush1.msra.mxu0 0.0
    %134 = vmatprep.subr.mxu0 0.0
    %135 = vmatpush1.msra.mxu0 0.0
    %136 = vmatprep.subr.mxu0 0.0
    %137 = vmatpush1.msra.mxu0 0.0
    %138 = vmatprep.subr.mxu0 0.0
    %139 = vmatpush1.msra.mxu0 0.0
    %140 = vmatprep.mubr.f32.mxu0 0.0
    %141 = vmatmul.mubr.f32.gmra.mrb[0].mxu0 %v65
    %v142 = vpop.f32.mrb[0].mxu0
    %v143 = vadd.f32 %v46, %v142
    %v144 = vpop.f32.mrb[0].mxu0
    %145 = vmatprep.mubr.f32.mxu0 0.0
    %146 = vmatmul.mubr.f32.gmra.mrb[0].mxu0 %v68
    %v147 = vpop.f32.mrb[0].mxu0
    %v148 = vadd.f32 %v51, %v147
    %v149 = vpop.f32.mrb[0].mxu0
    %150 = vmatprep.mubr.f32.mxu0 0.0
    %151 = vmatmul.mubr.f32.gmra.mrb[0].mxu0 %v71
    %v152 = vpop.f32.mrb[0].mxu0
    %v153 = vadd.f32 %v56, %v152
    %v154 = vpop.f32.mrb[0].mxu0
    %155 = vmatprep.mubr.f32.mxu0 0.0
    %156 = vmatmul.mubr.f32.gmra.mrb[0].mxu0 %v74
    %v157 = vpop.f32.mrb[0].mxu0
    %v158 = vadd.f32 %v61, %v157
    %v159 = vpop.f32.mrb[0].mxu0
    %160 = vdwg.mxu0
    %vm161 = vcmp.gt.f32.partialorder %v143, 0.0
    %vm162 = vcmp.gt.f32.partialorder %v148, 0.0
    %vm163 = vcmp.gt.f32.partialorder %v153, 0.0
    %vm164 = vcmp.gt.f32.partialorder %v158, 0.0
    %v165 = vmul.f32 %v143, 0.01
    %v166 = vmul.f32 %v148, 0.01
    %v167 = vmul.f32 %v153, 0.01
    %v168 = vmul.f32 %v158, 0.01
    %v169 = vsel %vm161, %v143, %v165
    %v170 = vsel %vm162, %v148, %v166
    %v171 = vsel %vm163, %v153, %v167
    %v172 = vsel %vm164, %v158, %v168
    %v173 = vld [vmem:[%s3] sm:$0xff]
    %v174 = vld [vmem:[%s3 + $0x8] sm:$0xff]
    %v175 = vld [vmem:[%s3 + $0x10] sm:$0xff]
    %v176 = vld [vmem:[%s3 + $0x18] sm:$0xff]
    %v177 = vld [vmem:[%s4] sm:$0xff]
    %v178 = vld [vmem:[%s4 + $0x8] sm:$0xff]
    %v179 = vld [vmem:[%s4 + $0x10] sm:$0xff]
    %v180 = vld [vmem:[%s4 + $0x18] sm:$0xff]
    %182 = vset.pattern.permute.xlu0 0
    %183 = vperm.xlu0 %182, %v177
    %v184 = vpop.permute.xlu0 %183
    %187 = vset.pattern.permute.xlu0 0
    %188 = vperm.xlu0 %187, %v178
    %v189 = vpop.permute.xlu0 %188
    %192 = vset.pattern.permute.xlu0 0
    %193 = vperm.xlu0 %192, %v179
    %v194 = vpop.permute.xlu0 %193
    %197 = vset.pattern.permute.xlu0 0
    %198 = vperm.xlu0 %197, %v180
    %v199 = vpop.permute.xlu0 %198
    %vm201 = vcmask 261120
    %v203 = vsel %vm201, %v173, 0
    %v206 = vsel %vm201, %v174, 0
    %v209 = vsel %vm201, %v175, 0
    %v212 = vsel %vm201, %v176, 0
    %214 = vmatprep.subr.mxu0 0.0
    %215 = vmatpush1.msra.mxu0 %v169
    %216 = vmatprep.subr.mxu0 0.0
    %217 = vmatpush1.msra.mxu0 %v170
    %218 = vmatprep.subr.mxu0 0.0
    %219 = vmatpush1.msra.mxu0 %v171
    %220 = vmatprep.subr.mxu0 0.0
    %221 = vmatpush1.msra.mxu0 %v172
    %222 = vmatprep.subr.mxu0 0.0
    %223 = vmatpush1.msra.mxu0 0.0
    %224 = vmatprep.subr.mxu0 0.0
    %225 = vmatpush1.msra.mxu0 0.0
    %226 = vmatprep.subr.mxu0 0.0
    %227 = vmatpush1.msra.mxu0 0.0
    %228 = vmatprep.subr.mxu0 0.0
    %229 = vmatpush1.msra.mxu0 0.0
    %230 = vmatprep.subr.mxu0 0.0
    %231 = vmatpush1.msra.mxu0 0.0
    %232 = vmatprep.subr.mxu0 0.0
    %233 = vmatpush1.msra.mxu0 0.0
    %234 = vmatprep.subr.mxu0 0.0
    %235 = vmatpush1.msra.mxu0 0.0
    %236 = vmatprep.subr.mxu0 0.0
    %237 = vmatpush1.msra.mxu0 0.0
    %238 = vmatprep.subr.mxu0 0.0
    %239 = vmatpush1.msra.mxu0 0.0
    %240 = vmatprep.subr.mxu0 0.0
    %241 = vmatpush1.msra.mxu0 0.0
    %242 = vmatprep.subr.mxu0 0.0
    %243 = vmatpush1.msra.mxu0 0.0
    %244 = vmatprep.subr.mxu0 0.0
    %245 = vmatpush1.msra.mxu0 0.0
    %246 = vmatprep.subr.mxu0 0.0
    %247 = vmatpush1.msra.mxu0 0.0
    %248 = vmatprep.subr.mxu0 0.0
    %249 = vmatpush1.msra.mxu0 0.0
    %250 = vmatprep.subr.mxu0 0.0
    %251 = vmatpush1.msra.mxu0 0.0
    %252 = vmatprep.subr.mxu0 0.0
    %253 = vmatpush1.msra.mxu0 0.0
    %254 = vmatprep.subr.mxu0 0.0
    %255 = vmatpush1.msra.mxu0 0.0
    %256 = vmatprep.subr.mxu0 0.0
    %257 = vmatpush1.msra.mxu0 0.0
    %258 = vmatprep.subr.mxu0 0.0
    %259 = vmatpush1.msra.mxu0 0.0
    %260 = vmatprep.subr.mxu0 0.0
    %261 = vmatpush1.msra.mxu0 0.0
    %262 = vmatprep.subr.mxu0 0.0
    %263 = vmatpush1.msra.mxu0 0.0
    %264 = vmatprep.subr.mxu0 0.0
    %265 = vmatpush1.msra.mxu0 0.0
    %266 = vmatprep.subr.mxu0 0.0
    %267 = vmatpush1.msra.mxu0 0.0
    %268 = vmatprep.subr.mxu0 0.0
    %269 = vmatpush1.msra.mxu0 0.0
    %270 = vmatprep.subr.mxu0 0.0
    %271 = vmatpush1.msra.mxu0 0.0
    %272 = vmatprep.subr.mxu0 0.0
    %273 = vmatpush1.msra.mxu0 0.0
    %274 = vmatprep.subr.mxu0 0.0
    %275 = vmatpush1.msra.mxu0 0.0
    %276 = vmatprep.subr.mxu0 0.0
    %277 = vmatpush1.msra.mxu0 0.0
    %278 = vmatprep.mubr.f32.mxu0 0.0
    %279 = vmatmul.mubr.f32.gmra.mrb[0].mxu0 %v203
    %v280 = vpop.f32.mrb[0].mxu0
    %v281 = vadd.f32 %v184, %v280
    %v282 = vpop.f32.mrb[0].mxu0
    %283 = vmatprep.mubr.f32.mxu0 0.0
    %284 = vmatmul.mubr.f32.gmra.mrb[0].mxu0 %v206
    %v285 = vpop.f32.mrb[0].mxu0
    %v286 = vadd.f32 %v189, %v285
    %v287 = vpop.f32.mrb[0].mxu0
    %288 = vmatprep.mubr.f32.mxu0 0.0
    %289 = vmatmul.mubr.f32.gmra.mrb[0].mxu0 %v209
    %v290 = vpop.f32.mrb[0].mxu0
    %v291 = vadd.f32 %v194, %v290
    %v292 = vpop.f32.mrb[0].mxu0
    %293 = vmatprep.mubr.f32.mxu0 0.0
    %294 = vmatmul.mubr.f32.gmra.mrb[0].mxu0 %v212
    %v295 = vpop.f32.mrb[0].mxu0
    %v296 = vadd.f32 %v199, %v295
    %v297 = vpop.f32.mrb[0].mxu0
    %298 = vdwg.mxu0
    %vm299 = vcmp.gt.f32.partialorder %v281, 0.0
    %vm300 = vcmp.gt.f32.partialorder %v286, 0.0
    %vm301 = vcmp.gt.f32.partialorder %v291, 0.0
    %vm302 = vcmp.gt.f32.partialorder %v296, 0.0
    %v303 = vmul.f32 %v281, 0.01
    %v304 = vmul.f32 %v286, 0.01
    %v305 = vmul.f32 %v291, 0.01
    %v306 = vmul.f32 %v296, 0.01
    %v307 = vsel %vm299, %v281, %v303
    %v308 = vsel %vm300, %v286, %v304
    %v309 = vsel %vm301, %v291, %v305
    %v310 = vsel %vm302, %v296, %v306
    %v311 = vld [vmem:[%s5] sm:$0xff]
    %v312 = vld [vmem:[%s5 + $0x8] sm:$0xff]
    %v313 = vld [vmem:[%s5 + $0x10] sm:$0xff]
    %v314 = vld [vmem:[%s5 + $0x18] sm:$0xff]
    %v315 = vld [vmem:[%s6] sm:$0xff]
    %v316 = vld [vmem:[%s6 + $0x8] sm:$0xff]
    %v317 = vld [vmem:[%s6 + $0x10] sm:$0xff]
    %v318 = vld [vmem:[%s6 + $0x18] sm:$0xff]
    %320 = vset.pattern.permute.xlu0 0
    %321 = vperm.xlu0 %320, %v315
    %v322 = vpop.permute.xlu0 %321
    %325 = vset.pattern.permute.xlu0 0
    %326 = vperm.xlu0 %325, %v316
    %v327 = vpop.permute.xlu0 %326
    %330 = vset.pattern.permute.xlu0 0
    %331 = vperm.xlu0 %330, %v317
    %v332 = vpop.permute.xlu0 %331
    %335 = vset.pattern.permute.xlu0 0
    %336 = vperm.xlu0 %335, %v318
    %v337 = vpop.permute.xlu0 %336
    %v340 = vsel %vm201, %v311, 0
    %v343 = vsel %vm201, %v312, 0
    %v346 = vsel %vm201, %v313, 0
    %v349 = vsel %vm201, %v314, 0
    %351 = vmatprep.subr.mxu0 0.0
    %352 = vmatpush1.msra.mxu0 %v307
    %353 = vmatprep.subr.mxu0 0.0
    %354 = vmatpush1.msra.mxu0 %v308
    %355 = vmatprep.subr.mxu0 0.0
    %356 = vmatpush1.msra.mxu0 %v309
    %357 = vmatprep.subr.mxu0 0.0
    %358 = vmatpush1.msra.mxu0 %v310
    %359 = vmatprep.subr.mxu0 0.0
    %360 = vmatpush1.msra.mxu0 0.0
    %361 = vmatprep.subr.mxu0 0.0
    %362 = vmatpush1.msra.mxu0 0.0
    %363 = vmatprep.subr.mxu0 0.0
    %364 = vmatpush1.msra.mxu0 0.0
    %365 = vmatprep.subr.mxu0 0.0
    %366 = vmatpush1.msra.mxu0 0.0
    %367 = vmatprep.subr.mxu0 0.0
    %368 = vmatpush1.msra.mxu0 0.0
    %369 = vmatprep.subr.mxu0 0.0
    %370 = vmatpush1.msra.mxu0 0.0
    %371 = vmatprep.subr.mxu0 0.0
    %372 = vmatpush1.msra.mxu0 0.0
    %373 = vmatprep.subr.mxu0 0.0
    %374 = vmatpush1.msra.mxu0 0.0
    %375 = vmatprep.subr.mxu0 0.0
    %376 = vmatpush1.msra.mxu0 0.0
    %377 = vmatprep.subr.mxu0 0.0
    %378 = vmatpush1.msra.mxu0 0.0
    %379 = vmatprep.subr.mxu0 0.0
    %380 = vmatpush1.msra.mxu0 0.0
    %381 = vmatprep.subr.mxu0 0.0
    %382 = vmatpush1.msra.mxu0 0.0
    %383 = vmatprep.subr.mxu0 0.0
    %384 = vmatpush1.msra.mxu0 0.0
    %385 = vmatprep.subr.mxu0 0.0
    %386 = vmatpush1.msra.mxu0 0.0
    %387 = vmatprep.subr.mxu0 0.0
    %388 = vmatpush1.msra.mxu0 0.0
    %389 = vmatprep.subr.mxu0 0.0
    %390 = vmatpush1.msra.mxu0 0.0
    %391 = vmatprep.subr.mxu0 0.0
    %392 = vmatpush1.msra.mxu0 0.0
    %393 = vmatprep.subr.mxu0 0.0
    %394 = vmatpush1.msra.mxu0 0.0
    %395 = vmatprep.subr.mxu0 0.0
    %396 = vmatpush1.msra.mxu0 0.0
    %397 = vmatprep.subr.mxu0 0.0
    %398 = vmatpush1.msra.mxu0 0.0
    %399 = vmatprep.subr.mxu0 0.0
    %400 = vmatpush1.msra.mxu0 0.0
    %401 = vmatprep.subr.mxu0 0.0
    %402 = vmatpush1.msra.mxu0 0.0
    %403 = vmatprep.subr.mxu0 0.0
    %404 = vmatpush1.msra.mxu0 0.0
    %405 = vmatprep.subr.mxu0 0.0
    %406 = vmatpush1.msra.mxu0 0.0
    %407 = vmatprep.subr.mxu0 0.0
    %408 = vmatpush1.msra.mxu0 0.0
    %409 = vmatprep.subr.mxu0 0.0
    %410 = vmatpush1.msra.mxu0 0.0
    %411 = vmatprep.subr.mxu0 0.0
    %412 = vmatpush1.msra.mxu0 0.0
    %413 = vmatprep.subr.mxu0 0.0
    %414 = vmatpush1.msra.mxu0 0.0
    %415 = vmatprep.mubr.f32.mxu0 0.0
    %416 = vmatmul.mubr.f32.gmra.mrb[0].mxu0 %v340
    %v417 = vpop.f32.mrb[0].mxu0
    %v418 = vadd.f32 %v322, %v417
    %v419 = vpop.f32.mrb[0].mxu0
    %420 = vmatprep.mubr.f32.mxu0 0.0
    %421 = vmatmul.mubr.f32.gmra.mrb[0].mxu0 %v343
    %v422 = vpop.f32.mrb[0].mxu0
    %v423 = vadd.f32 %v327, %v422
    %v424 = vpop.f32.mrb[0].mxu0
    %425 = vmatprep.mubr.f32.mxu0 0.0
    %426 = vmatmul.mubr.f32.gmra.mrb[0].mxu0 %v346
    %v427 = vpop.f32.mrb[0].mxu0
    %v428 = vadd.f32 %v332, %v427
    %v429 = vpop.f32.mrb[0].mxu0
    %430 = vmatprep.mubr.f32.mxu0 0.0
    %431 = vmatmul.mubr.f32.gmra.mrb[0].mxu0 %v349
    %v432 = vpop.f32.mrb[0].mxu0
    %v433 = vadd.f32 %v337, %v432
    %v434 = vpop.f32.mrb[0].mxu0
    %435 = vdwg.mxu0
    %vm436 = vcmp.gt.f32.partialorder %v418, 0.0
    %vm437 = vcmp.gt.f32.partialorder %v423, 0.0
    %vm438 = vcmp.gt.f32.partialorder %v428, 0.0
    %vm439 = vcmp.gt.f32.partialorder %v433, 0.0
    %v440 = vmul.f32 %v418, 0.01
    %v441 = vmul.f32 %v423, 0.01
    %v442 = vmul.f32 %v428, 0.01
    %v443 = vmul.f32 %v433, 0.01
    %v444 = vsel %vm436, %v418, %v440
    %v445 = vsel %vm437, %v423, %v441
    %v446 = vsel %vm438, %v428, %v442
    %v447 = vsel %vm439, %v433, %v443
    %v448 = vld [vmem:[%s7] sm:$0xff]
    %v449 = vld [vmem:[%s8] sm:$0xff]
    %451 = vset.pattern.permute.xlu0 0
    %452 = vperm.xlu0 %451, %v449
    %v453 = vpop.permute.xlu0 %452
    %v456 = vsel %vm201, %v448, 0
    %458 = vmatprep.subr.mxu0 0.0
    %459 = vmatpush1.msra.mxu0 %v444
    %460 = vmatprep.subr.mxu0 0.0
    %461 = vmatpush1.msra.mxu0 %v445
    %462 = vmatprep.subr.mxu0 0.0
    %463 = vmatpush1.msra.mxu0 %v446
    %464 = vmatprep.subr.mxu0 0.0
    %465 = vmatpush1.msra.mxu0 %v447
    %466 = vmatprep.subr.mxu0 0.0
    %467 = vmatpush1.msra.mxu0 0.0
    %468 = vmatprep.subr.mxu0 0.0
    %469 = vmatpush1.msra.mxu0 0.0
    %470 = vmatprep.subr.mxu0 0.0
    %471 = vmatpush1.msra.mxu0 0.0
    %472 = vmatprep.subr.mxu0 0.0
    %473 = vmatpush1.msra.mxu0 0.0
    %474 = vmatprep.subr.mxu0 0.0
    %475 = vmatpush1.msra.mxu0 0.0
    %476 = vmatprep.subr.mxu0 0.0
    %477 = vmatpush1.msra.mxu0 0.0
    %478 = vmatprep.subr.mxu0 0.0
    %479 = vmatpush1.msra.mxu0 0.0
    %480 = vmatprep.subr.mxu0 0.0
    %481 = vmatpush1.msra.mxu0 0.0
    %482 = vmatprep.subr.mxu0 0.0
    %483 = vmatpush1.msra.mxu0 0.0
    %484 = vmatprep.subr.mxu0 0.0
    %485 = vmatpush1.msra.mxu0 0.0
    %486 = vmatprep.subr.mxu0 0.0
    %487 = vmatpush1.msra.mxu0 0.0
    %488 = vmatprep.subr.mxu0 0.0
    %489 = vmatpush1.msra.mxu0 0.0
    %490 = vmatprep.subr.mxu0 0.0
    %491 = vmatpush1.msra.mxu0 0.0
    %492 = vmatprep.subr.mxu0 0.0
    %493 = vmatpush1.msra.mxu0 0.0
    %494 = vmatprep.subr.mxu0 0.0
    %495 = vmatpush1.msra.mxu0 0.0
    %496 = vmatprep.subr.mxu0 0.0
    %497 = vmatpush1.msra.mxu0 0.0
    %498 = vmatprep.subr.mxu0 0.0
    %499 = vmatpush1.msra.mxu0 0.0
    %500 = vmatprep.subr.mxu0 0.0
    %501 = vmatpush1.msra.mxu0 0.0
    %502 = vmatprep.subr.mxu0 0.0
    %503 = vmatpush1.msra.mxu0 0.0
    %504 = vmatprep.subr.mxu0 0.0
    %505 = vmatpush1.msra.mxu0 0.0
    %506 = vmatprep.subr.mxu0 0.0
    %507 = vmatpush1.msra.mxu0 0.0
    %508 = vmatprep.subr.mxu0 0.0
    %509 = vmatpush1.msra.mxu0 0.0
    %510 = vmatprep.subr.mxu0 0.0
    %511 = vmatpush1.msra.mxu0 0.0
    %512 = vmatprep.subr.mxu0 0.0
    %513 = vmatpush1.msra.mxu0 0.0
    %514 = vmatprep.subr.mxu0 0.0
    %515 = vmatpush1.msra.mxu0 0.0
    %516 = vmatprep.subr.mxu0 0.0
    %517 = vmatpush1.msra.mxu0 0.0
    %518 = vmatprep.subr.mxu0 0.0
    %519 = vmatpush1.msra.mxu0 0.0
    %520 = vmatprep.subr.mxu0 0.0
    %521 = vmatpush1.msra.mxu0 0.0
    %522 = vmatprep.mubr.f32.mxu0 0.0
    %523 = vmatmul.mubr.f32.gmra.mrb[0].mxu0 %v456
    %v524 = vpop.f32.mrb[0].mxu0
    %v525 = vadd.f32 %v453, %v524
    %v526 = vpop.f32.mrb[0].mxu0
    %527 = vdwg.mxu0
    %vm528 = vcmask 64512
    %529 = vst.msk [vmem:[#allocation2] sm:$0xff] %vm528, %v525
    // Predicated region
    $region38: #{tpu_custom_call.1} parent=1 // pred_check
      _
    $region39: #{tpu_custom_call.1} parent=1 // pred_check_branch
      %531 = sbr.rel (0) target = $region41
    $region40: #{tpu_custom_call.1} parent=1 // pred_region
      %s533 = ssub.s32 128, 128
      %534 = vsyncadd [#allocation3], %s533
      %s536 = sshll.u32 [#allocation2], 4
      %s537 = int_to_ptr.vmem [resolvable:$true] %s536
      %539 = dma.vmem_to_hbm [thread:$0]  %s537, 128, %s9, [#allocation3]
    $region41: #{tpu_custom_call.1} parent=1 // pred_fallthru
      _
    // Predicated region
    $region42: #{tpu_custom_call.1} parent=1 // pred_check
      _
    $region43: #{tpu_custom_call.1} parent=1 // pred_check_branch
      %541 = sbr.rel (0) target = $region45
    $region44: #{tpu_custom_call.1} parent=1 // pred_region
      %542 = dma.done [#allocation3], 128
    $region45: #{tpu_custom_call.1} parent=1 // pred_fallthru
      _
    %543 = vsyncpa [#allocation3], 1

</llo_original>
